<compile_context>
chip_gen: v7x
topology: tpu7x:2x2x1
jax: 0.10.0
libtpu: 0.0.40
codegen_flags: <defaults>
</compile_context>

<pallas_src>
import functools
import math

import jax
import jax.numpy as jnp
from jax.experimental import pallas as pl
from jax.experimental.pallas import tpu as pltpu


_MAX_PACKED_WIDTH = 512                  # cap on d_packed for the lane-packing path
_TARGET_INPUT_BYTES = 4 * 1024 * 1024    # ~4 MiB of input per grid step


def _rmsnorm_kernel(*refs, eps, use_bias, packed):
    # refs layout: x, alpha, [beta], [seg], out
    x_ref, alpha_ref = refs[0], refs[1]
    idx = 2
    beta_ref = None
    if use_bias:
        beta_ref = refs[idx]
        idx += 1
    seg_ref = None
    if packed:
        seg_ref = refs[idx]
        idx += 1
    o_ref = refs[idx]

    x = x_ref[...].astype(jnp.float32)          # (tm, d_packed)
    sq = x * x

    if packed:
        # Block-diagonal (d_packed, d_packed) segment matrix, already scaled by
        # 1/d_model in the wrapper: each lane ends up holding the mean of
        # squares of its own d_model-wide segment, broadcast across that
        # segment.  Runs on the MXU (slack unit for this HBM-bound kernel) and
        # keeps everything lane-dense.  Row-local, so partial-block garbage
        # rows never contaminate valid rows.
        ms = jnp.dot(sq, seg_ref[...], preferred_element_type=jnp.float32)
    else:
        ms = jnp.mean(sq, axis=-1, keepdims=True)   # (tm, 1)

    inv_rms = jax.lax.rsqrt(ms + eps)
    out = (x * inv_rms) * alpha_ref[...].astype(jnp.float32)
    if use_bias:
        out = out + beta_ref[...].astype(jnp.float32)
    o_ref[...] = out.astype(o_ref.dtype)


def _default_vmem_limit_bytes():
    # Raise the scoped-VMEM limit explicitly: the default is only 16 MiB on
    # v5e / 32 MiB on v6e+v7x, far below what byte-targeted blocks need.
    try:
        cap = int(pltpu.get_tpu_info().vmem_capacity_bytes)
    except Exception:
        cap = 64 * 1024 * 1024  # conservative (v7x per-TC) fallback
    # ~3/4 of physical, capped: 96 MiB on v5e/v6e (128 MiB), 48 MiB on v7x (64 MiB)
    return int(min(max(cap * 3 // 4, 32 * 1024 * 1024), 96 * 1024 * 1024))


def _sublane_tile(itemsize):
    # Native sublane tiles: f32 -> 8, bf16/f16 -> 16, int8/fp8 -> 32.
    return max(8, 32 // int(itemsize))


def _pick_block_rows(d_packed, itemsize, vmem_limit_bytes, tile):
    row_in_bytes = d_packed * itemsize
    # Per-row VMEM: double-buffered input + double-buffered output tiles plus
    # ~2 f32 temporaries (upcast x / fused out).  This already charges the 2x
    # for pipelining, so the budget is ~0.8 of the scoped limit (not halved
    # again).
    per_row_vmem = d_packed * (2 * itemsize + 2 * itemsize + 2 * 4)
    budget = int(0.8 * vmem_limit_bytes)
    by_target = _TARGET_INPUT_BYTES // max(row_in_bytes, 1)
    by_vmem = budget // max(per_row_vmem, 1)
    cand = max(tile, min(by_target, by_vmem))
    return int((cand // tile) * tile)


def adaptive_rms_norm(x, alpha, beta=None, *, eps=1e-5, block_rows=None,
                      vmem_limit_bytes=None):
    """Adaptive RMSNorm.  x: (..., d_model), alpha/beta: (d_model,)."""
    orig_shape = x.shape
    d_model = int(orig_shape[-1])
    rows = int(math.prod(orig_shape[:-1])) if len(orig_shape) > 1 else 1
    use_bias = beta is not None

    # --- lane packing: fold G consecutive rows into one lane-dense packed row
    #     whenever d_model is not a multiple of 128 (keeps stores unmasked).
    packed = False
    G = 1
    if d_model % 128 != 0:
        lcm = (d_model * 128) // math.gcd(d_model, 128)
        g = lcm // d_model
        if lcm <= _MAX_PACKED_WIDTH and rows % g == 0:
            packed = True
            G = g
    d_packed = G * d_model
    n_rows = rows // G

    x2d = x.reshape(n_rows, d_packed)   # contiguous reshape: free (no HBM copy)

    alpha_row = jnp.tile(alpha, (G,)) if G > 1 else alpha
    inputs = [x2d, alpha_row.reshape(1, d_packed)]

    if use_bias:
        beta_row = jnp.tile(beta, (G,)) if G > 1 else beta
        inputs.append(beta_row.reshape(1, d_packed))

    if packed:
        lane = jnp.arange(d_packed, dtype=jnp.int32)
        seg_id = lane // d_model
        seg_mat = (seg_id[:, None] == seg_id[None, :]).astype(jnp.float32)
        seg_mat = seg_mat * (1.0 / d_model)   # fold mean scale into the MXU matmul
        inputs.append(seg_mat)

    # --- tiling / VMEM budget
    if vmem_limit_bytes is None:
        vmem_limit_bytes = _default_vmem_limit_bytes()
    itemsize = jnp.dtype(x.dtype).itemsize
    tile = _sublane_tile(itemsize)

    if block_rows is None:
        block_rows = _pick_block_rows(d_packed, itemsize, vmem_limit_bytes, tile)
    else:
        block_rows = max(tile, (int(block_rows) // tile) * tile)

    if block_rows >= n_rows:
        if n_rows >= 2 * tile:
            # Keep >= 2 grid steps: v7x has 2 TensorCores (the "parallel" grid
            # axis is sharded across them) and a multi-step grid preserves
            # DMA/compute/write-back overlap on every generation.
            half = pl.cdiv(n_rows, 2)
            block_rows = ((half + tile - 1) // tile) * tile
        else:
            block_rows = n_rows      # tiny input: single full-array block (legal)

    grid = (pl.cdiv(n_rows, block_rows),)   # partial last block masked by Pallas

    in_specs = [
        pl.BlockSpec((block_rows, d_packed), lambda i: (i, 0)),
        pl.BlockSpec((1, d_packed), lambda i: (0, 0)),
    ]
    if use_bias:
        in_specs.append(pl.BlockSpec((1, d_packed), lambda i: (0, 0)))
    if packed:
        in_specs.append(pl.BlockSpec((d_packed, d_packed), lambda i: (0, 0)))

    kernel = functools.partial(
        _rmsnorm_kernel, eps=float(eps), use_bias=use_bias, packed=packed)

    out2d = pl.pallas_call(
        kernel,
        out_shape=jax.ShapeDtypeStruct((n_rows, d_packed), x.dtype),
        grid=grid,
        in_specs=in_specs,
        out_specs=pl.BlockSpec((block_rows, d_packed), lambda i: (i, 0)),
        compiler_params=pltpu.CompilerParams(
            dimension_semantics=("parallel",),
            vmem_limit_bytes=int(vmem_limit_bytes),
        ),
    )(*inputs)

    return out2d.reshape(orig_shape)


def _reference(x, alpha, beta=None, eps=1e-5):
    xf = x.astype(jnp.float32)
    rms = jnp.sqrt(jnp.mean(xf * xf, axis=-1, keepdims=True) + eps)
    out = alpha.astype(jnp.float32) * (xf / rms)
    if beta is not None:
        out = out + beta.astype(jnp.float32)
    return out.astype(x.dtype)


if __name__ == "__main__":
    key = jax.random.PRNGKey(0)
    k_x, k_a, k_b, k_x2, k_x3 = jax.random.split(key, 5)
    eps = 1e-5

    # Case 1: d_model=32 (packed lane-dense path), feature-last layout of the
    # module (batch=2, seq=8, d_model=32), with and without bias.
    batch, seq, d_model = 2, 8, 32
    x = jax.random.normal(k_x, (batch, seq, d_model), dtype=jnp.float32)
    alpha = 1.0 + 0.1 * jax.random.normal(k_a, (d_model,), dtype=jnp.float32)
    beta = 0.1 * jax.random.normal(k_b, (d_model,), dtype=jnp.float32)

    out = jax.block_until_ready(adaptive_rms_norm(x, alpha, beta=None, eps=eps))
    ref = _reference(x, alpha, beta=None, eps=eps)
    assert jnp.allclose(out, ref, atol=1e-5, rtol=1e-5), "mismatch (no bias, packed)"

    out_b = jax.block_until_ready(adaptive_rms_norm(x, alpha, beta=beta, eps=eps))
    ref_b = _reference(x, alpha, beta=beta, eps=eps)
    assert jnp.allclose(out_b, ref_b, atol=1e-5, rtol=1e-5), "mismatch (bias, packed)"

    # Case 2: d_model=128 (direct lane-dense path, rows not a multiple of 8).
    b2, s2, d2 = 3, 5, 128
    x2 = jax.random.normal(k_x2, (b2, s2, d2), dtype=jnp.float32)
    a2 = 1.0 + 0.05 * jax.random.normal(k_a, (d2,), dtype=jnp.float32)
    out2 = jax.block_until_ready(adaptive_rms_norm(x2, a2, beta=None, eps=eps))
    ref2 = _reference(x2, a2, beta=None, eps=eps)
    assert jnp.allclose(out2, ref2, atol=1e-5, rtol=1e-5), "mismatch (d_model=128)"

    # Case 3: bf16 input, d_model=64 (packed, G=2), enough rows to exercise the
    # >=2-step grid split and the 16-row bf16 sublane tile.
    b3, s3, d3 = 2, 32, 64
    x3 = jax.random.normal(k_x3, (b3, s3, d3), dtype=jnp.float32).astype(jnp.bfloat16)
    a3 = (1.0 + 0.1 * jax.random.normal(k_a, (d3,), dtype=jnp.float32)).astype(jnp.bfloat16)
    out3 = jax.block_until_ready(adaptive_rms_norm(x3, a3, beta=None, eps=eps))
    ref3 = _reference(x3, a3, beta=None, eps=eps)
    assert jnp.allclose(out3.astype(jnp.float32), ref3.astype(jnp.float32),
                        atol=2e-2, rtol=2e-2), "mismatch (bf16, d_model=64)"

    print("KERNEL_OK")
</pallas_src>

<mosaic_0001>
module attributes {stable_mosaic.version = 11 : i64} {
  func.func @_rmsnorm_kernel(%arg0: i32, %arg1: memref<4x128xf32, #tpu.memory_space<vmem>>, %arg2: memref<1x128xf32, #tpu.memory_space<vmem>>, %arg3: memref<128x128xf32, #tpu.memory_space<vmem>>, %arg4: memref<4x128xf32, #tpu.memory_space<vmem>>) attributes {dimension_semantics = [#tpu.dimension_semantics<parallel>], iteration_bounds = array<i64: 1>, scalar_prefetch = 0 : i64, scratch_operands = 0 : i64, tpu.core_type = #tpu.core_type<tc>, window_params = [{transform_indices = @transform_0, window_bounds = array<i64: 4, 128>}, {pipeline_mode = #tpu.pipeline_mode<synchronous>, transform_indices = @transform_1, window_bounds = array<i64: 1, 128>}, {pipeline_mode = #tpu.pipeline_mode<synchronous>, transform_indices = @transform_2, window_bounds = array<i64: 128, 128>}, {transform_indices = @transform_3, window_bounds = array<i64: 4, 128>}]} {
    %c0 = arith.constant 0 : index
    %c0_0 = arith.constant 0 : index
    %0 = vector.load %arg1[%c0, %c0_0] : memref<4x128xf32, #tpu.memory_space<vmem>>, vector<4x128xf32>
    %1 = arith.mulf %0, %0 : vector<4x128xf32>
    %c0_1 = arith.constant 0 : index
    %c0_2 = arith.constant 0 : index
    %2 = vector.load %arg3[%c0_1, %c0_2] : memref<128x128xf32, #tpu.memory_space<vmem>>, vector<128x128xf32>
    %cst = arith.constant dense<0.000000e+00> : vector<4x128xf32>
    %3 = tpu.matmul %1, %2, %cst {dimension_numbers = #tpu.dot_dimension_numbers<[1], [0], [0], [1], [0, 0, 1, 1], [], []>} : vector<4x128xf32>, vector<128x128xf32>, vector<4x128xf32> -> vector<4x128xf32>
    %cst_3 = arith.constant 9.99999974E-6 : f32
    %4 = vector.broadcast %cst_3 : f32 to vector<4x128xf32>
    %5 = arith.addf %3, %4 : vector<4x128xf32>
    %6 = math.rsqrt %5 : vector<4x128xf32>
    %7 = arith.mulf %0, %6 : vector<4x128xf32>
    %c0_4 = arith.constant 0 : index
    %c0_5 = arith.constant 0 : index
    %8 = vector.load %arg2[%c0_4, %c0_5] : memref<1x128xf32, #tpu.memory_space<vmem>>, vector<1x128xf32>
    %9 = vector.broadcast %8 : vector<1x128xf32> to vector<4x128xf32>
    %10 = arith.mulf %7, %9 : vector<4x128xf32>
    %c0_6 = arith.constant 0 : index
    %c0_7 = arith.constant 0 : index
    %11 = vector.load %arg4[%c0_6, %c0_7] : memref<4x128xf32, #tpu.memory_space<vmem>>, vector<4x128xf32>
    tpu.vector_store %arg4[%c0_6, %c0_7], %10 {strides = array<i32>} : memref<4x128xf32, #tpu.memory_space<vmem>>, vector<4x128xf32>,
    return
  }
  func.func @transform_0(%arg0: i32) -> (i32, i32) {
    %c0_i32 = arith.constant 0 : i32
    %c0_i32_0 = arith.constant 0 : i32
    return %arg0, %c0_i32 : i32, i32
  }
  func.func @transform_1(%arg0: i32) -> (i32, i32) {
    %c0_i32 = arith.constant 0 : i32
    %c0_i32_0 = arith.constant 0 : i32
    %c0_i32_1 = arith.constant 0 : i32
    return %c0_i32, %c0_i32_0 : i32, i32
  }
  func.func @transform_2(%arg0: i32) -> (i32, i32) {
    %c0_i32 = arith.constant 0 : i32
    %c0_i32_0 = arith.constant 0 : i32
    %c0_i32_1 = arith.constant 0 : i32
    return %c0_i32, %c0_i32_0 : i32, i32
  }
  func.func @transform_3(%arg0: i32) -> (i32, i32) {
    %c0_i32 = arith.constant 0 : i32
    %c0_i32_0 = arith.constant 0 : i32
    return %arg0, %c0_i32 : i32, i32
  }
}

</mosaic_0001>

<llo_original>
// kernel: tpu_custom_call.1
$region0: #{tpu_custom_call.1}
  #allocation0 [shape = 'u32[]', space=smem, size = 0x4, offset = 0x4, fixed_abs, tag = 'smem constant byte address 0x4 - core index']
  #allocation1 [shape = 'u32[144,128]{1,0:T(1,128)}', space=vmem, size = 0x12000, scoped, tag = 'internal scratch']
  %s0 = inlined_call_operand.hbm [shape: f32[4,128], index: 0, kind: input, shape index: {}]
  %s1 = inlined_call_operand.vmem [shape: f32[1,128], index: 1, kind: input, shape index: {}]
  %s2 = inlined_call_operand.hbm [shape: f32[128,128], index: 2, kind: input, shape index: {}]
  %s3 = inlined_call_operand.hbm [shape: f32[4,128], index: 3, kind: output, shape index: {}]
  %s4 = sld [smem:[#allocation0]]
  $region30: #{tpu_custom_call.1} parent=0
    _
  %s6 = ssub.s32 1, %s4
  %s7 = scalar_select 0, %s6, %s4
  $region1: #{tpu_custom_call.1} parent=0
    #allocation2 [shape = 'u8[2048]{0}', space=vmem, size = 0x800, scoped, tag = 'input window, operand 0, single buffered']
    #allocation3 [shape = 's32[1]{0}', space=sflag, size = 0x4, scoped, tag = 'scoped memory for tpu_custom_call.1']
    #allocation4 [shape = 's32[1]{0}', space=sflag, size = 0x4, scoped, tag = 'scoped memory for tpu_custom_call.1']
    #allocation5 [shape = 'u8[65536]{0}', space=vmem, size = 0x10000, scoped, tag = 'input window, operand 2, single buffered']
    #allocation6 [shape = 's32[1]{0}', space=sflag, size = 0x4, scoped, tag = 'scoped memory for tpu_custom_call.1']
    #allocation7 [shape = 'u8[2048]{0}', space=vmem, size = 0x800, scoped, tag = 'output window, operand 0, single buffered']
    %8 = vsyncpa [#allocation3], 0
    %9 = vsyncpa [#allocation6], 0
    %10 = vsyncpa [#allocation4], 0
    // Predicated region
    $region2: #{tpu_custom_call.1} parent=1 // pred_check
      _
    $region3: #{tpu_custom_call.1} parent=1 // pred_check_branch
      %12 = sbr.rel (0) target = $region5
    $region4: #{tpu_custom_call.1} parent=1 // pred_region
      %s14 = ssub.s32 64, 64
      %15 = vsyncadd [#allocation3], %s14
      %s17 = sshll.u32 [#allocation2], 4
      %s18 = int_to_ptr.vmem [resolvable:$true] %s17
      %20 = dma.hbm_to_vmem [thread:$0]  %s0, 64, %s18, [#allocation3]
    $region5: #{tpu_custom_call.1} parent=1 // pred_fallthru
      _
    // Predicated region
    $region6: #{tpu_custom_call.1} parent=1 // pred_check
      _
    $region7: #{tpu_custom_call.1} parent=1 // pred_check_branch
      %22 = sbr.rel (0) target = $region9
    $region8: #{tpu_custom_call.1} parent=1 // pred_region
      _
    $region9: #{tpu_custom_call.1} parent=1 // pred_fallthru
      _
    // Predicated region
    $region10: #{tpu_custom_call.1} parent=1 // pred_check
      _
    $region11: #{tpu_custom_call.1} parent=1 // pred_check_branch
      %24 = sbr.rel (0) target = $region13
    $region12: #{tpu_custom_call.1} parent=1 // pred_region
      %s26 = ssub.s32 2048, 2048
      %27 = vsyncadd [#allocation6], %s26
      %s28 = sshll.u32 [#allocation5], 4
      %s29 = int_to_ptr.vmem [resolvable:$true] %s28
      %34 = dma.hbm_to_vmem [thread:$0]  %s2, 2048, %s29, [#allocation6], 128, 128, 8
    $region13: #{tpu_custom_call.1} parent=1 // pred_fallthru
      _
    // Predicated region
    $region14: #{tpu_custom_call.1} parent=1 // pred_check
      _
    $region15: #{tpu_custom_call.1} parent=1 // pred_check_branch
      %36 = sbr.rel (0) target = $region17
    $region16: #{tpu_custom_call.1} parent=1 // pred_region
      %37 = dma.done [#allocation3], 64
    $region17: #{tpu_custom_call.1} parent=1 // pred_fallthru
      _
    // Predicated region
    $region18: #{tpu_custom_call.1} parent=1 // pred_check
      _
    $region19: #{tpu_custom_call.1} parent=1 // pred_check_branch
      %39 = sbr.rel (0) target = $region21
    $region20: #{tpu_custom_call.1} parent=1 // pred_region
      %40 = dma.done [#allocation6], 2048
    $region21: #{tpu_custom_call.1} parent=1 // pred_fallthru
      _
    %v41 = vld [vmem:[#allocation2] sm:$0xf]
    %v42 = vmul.f32 %v41, %v41
    %v43 = vld [vmem:[#allocation5] sm:$0xff]
    %v44 = vld [vmem:[#allocation5 + $0x8] sm:$0xff]
    %v45 = vld [vmem:[#allocation5 + $0x10] sm:$0xff]
    %v46 = vld [vmem:[#allocation5 + $0x18] sm:$0xff]
    %v47 = vld [vmem:[#allocation5 + $0x20] sm:$0xff]
    %v48 = vld [vmem:[#allocation5 + $0x28] sm:$0xff]
    %v49 = vld [vmem:[#allocation5 + $0x30] sm:$0xff]
    %v50 = vld [vmem:[#allocation5 + $0x38] sm:$0xff]
    %v51 = vld [vmem:[#allocation5 + $0x40] sm:$0xff]
    %v52 = vld [vmem:[#allocation5 + $0x48] sm:$0xff]
    %v53 = vld [vmem:[#allocation5 + $0x50] sm:$0xff]
    %v54 = vld [vmem:[#allocation5 + $0x58] sm:$0xff]
    %v55 = vld [vmem:[#allocation5 + $0x60] sm:$0xff]
    %v56 = vld [vmem:[#allocation5 + $0x68] sm:$0xff]
    %v57 = vld [vmem:[#allocation5 + $0x70] sm:$0xff]
    %v58 = vld [vmem:[#allocation5 + $0x78] sm:$0xff]
    %59 = vmatprep.subr.mxu0 0.0
    %60 = vmatpush1.msra.mxu0 %v43
    %61 = vmatprep.subr.mxu0 0.0
    %62 = vmatpush1.msra.mxu0 %v44
    %63 = vmatprep.subr.mxu0 0.0
    %64 = vmatpush1.msra.mxu0 %v45
    %65 = vmatprep.subr.mxu0 0.0
    %66 = vmatpush1.msra.mxu0 %v46
    %67 = vmatprep.subr.mxu0 0.0
    %68 = vmatpush1.msra.mxu0 %v47
    %69 = vmatprep.subr.mxu0 0.0
    %70 = vmatpush1.msra.mxu0 %v48
    %71 = vmatprep.subr.mxu0 0.0
    %72 = vmatpush1.msra.mxu0 %v49
    %73 = vmatprep.subr.mxu0 0.0
    %74 = vmatpush1.msra.mxu0 %v50
    %75 = vmatprep.subr.mxu0 0.0
    %76 = vmatpush1.msra.mxu0 %v51
    %77 = vmatprep.subr.mxu0 0.0
    %78 = vmatpush1.msra.mxu0 %v52
    %79 = vmatprep.subr.mxu0 0.0
    %80 = vmatpush1.msra.mxu0 %v53
    %81 = vmatprep.subr.mxu0 0.0
    %82 = vmatpush1.msra.mxu0 %v54
    %83 = vmatprep.subr.mxu0 0.0
    %84 = vmatpush1.msra.mxu0 %v55
    %85 = vmatprep.subr.mxu0 0.0
    %86 = vmatpush1.msra.mxu0 %v56
    %87 = vmatprep.subr.mxu0 0.0
    %88 = vmatpush1.msra.mxu0 %v57
    %89 = vmatprep.subr.mxu0 0.0
    %90 = vmatpush1.msra.mxu0 %v58
    %91 = vmatprep.subr.mxu0 0.0
    %92 = vmatpush1.msra.mxu0 0.0
    %93 = vmatprep.subr.mxu0 0.0
    %94 = vmatpush1.msra.mxu0 0.0
    %95 = vmatprep.subr.mxu0 0.0
    %96 = vmatpush1.msra.mxu0 0.0
    %97 = vmatprep.subr.mxu0 0.0
    %98 = vmatpush1.msra.mxu0 0.0
    %99 = vmatprep.subr.mxu0 0.0
    %100 = vmatpush1.msra.mxu0 0.0
    %101 = vmatprep.subr.mxu0 0.0
    %102 = vmatpush1.msra.mxu0 0.0
    %103 = vmatprep.subr.mxu0 0.0
    %104 = vmatpush1.msra.mxu0 0.0
    %105 = vmatprep.subr.mxu0 0.0
    %106 = vmatpush1.msra.mxu0 0.0
    %107 = vmatprep.subr.mxu0 0.0
    %108 = vmatpush1.msra.mxu0 0.0
    %109 = vmatprep.subr.mxu0 0.0
    %110 = vmatpush1.msra.mxu0 0.0
    %111 = vmatprep.subr.mxu0 0.0
    %112 = vmatpush1.msra.mxu0 0.0
    %113 = vmatprep.subr.mxu0 0.0
    %114 = vmatpush1.msra.mxu0 0.0
    %115 = vmatprep.subr.mxu0 0.0
    %116 = vmatpush1.msra.mxu0 0.0
    %117 = vmatprep.subr.mxu0 0.0
    %118 = vmatpush1.msra.mxu0 0.0
    %119 = vmatprep.subr.mxu0 0.0
    %120 = vmatpush1.msra.mxu0 0.0
    %121 = vmatprep.subr.mxu0 0.0
    %122 = vmatpush1.msra.mxu0 0.0
    %123 = vmatprep.mubr.f32.mxu0 0.0
    %124 = vmatmul.mubr.f32.gmra.mrb[0].mxu0 %v42
    %v125 = vpop.f32.mrb[0].mxu0
    %v126 = vadd.f32 1e-05, %v125
    %v127 = vpop.f32.mrb[0].mxu0
    %128 = vdwg.mxu0
    %v129 = vrsqrt.pop %v126
    %v130 = vmul.f32 %v41, %v129
    %v131 = vld [vmem:[%s1] sm:$0x1]
    %v133 = vlaneseq
    %v134 = vshrl.u32 %v133, 7
    %v135 = vsub.s32 0, %v134
    %v136 = vrot.slane %v131, %v135
    %v138 = vmul.f32 %v130, %v136
    %139 = vst [vmem:[#allocation7] sm:$0xf] %v138
    // Predicated region
    $region22: #{tpu_custom_call.1} parent=1 // pred_check
      _
    $region23: #{tpu_custom_call.1} parent=1 // pred_check_branch
      %141 = sbr.rel (0) target = $region25
    $region24: #{tpu_custom_call.1} parent=1 // pred_region
      %s143 = ssub.s32 64, 64
      %144 = vsyncadd [#allocation4], %s143
      %s146 = sshll.u32 [#allocation7], 4
      %s147 = int_to_ptr.vmem [resolvable:$true] %s146
      %149 = dma.vmem_to_hbm [thread:$0]  %s147, 64, %s3, [#allocation4]
    $region25: #{tpu_custom_call.1} parent=1 // pred_fallthru
      _
    // Predicated region
    $region26: #{tpu_custom_call.1} parent=1 // pred_check
      _
    $region27: #{tpu_custom_call.1} parent=1 // pred_check_branch
      %151 = sbr.rel (0) target = $region29
    $region28: #{tpu_custom_call.1} parent=1 // pred_region
      %152 = dma.done [#allocation4], 64
    $region29: #{tpu_custom_call.1} parent=1 // pred_fallthru
      _
    %153 = vsyncpa [#allocation3], 1
    %154 = vsyncpa [#allocation6], 1
    %155 = vsyncpa [#allocation4], 1

</llo_original>
